<compile_context>
chip_gen: v7x
topology: tpu7x:2x2x1
jax: 0.10.0
libtpu: 0.0.40
codegen_flags: <defaults>
</compile_context>

<pallas_src>
import jax
import jax.numpy as jnp
from jax.experimental import pallas as pl
from jax.experimental.pallas import tpu as pltpu

# Quantization parameters from the PyTorch module (dequantize_per_tensor).
X_SCALE, X_ZP = 0.199, 65      # x: uint8 [M, K]
Y_SCALE, Y_ZP = 0.0215, 160    # y: uint8 [K, N]


def _mm_quint8_kernel(x_ref, y_ref, o_ref):
    """Compute one (M, TN) output tile with zero-points folded into an epilogue."""
    m, k = x_ref.shape

    # uint8 -> i32 -> f32 -> bf16: every step is exact for values 0..255,
    # and the 8-bit tiles are what lives in VMEM (no f32 expansion of y as
    # a matmul operand).
    x_f32 = x_ref[...].astype(jnp.int32).astype(jnp.float32)          # (M, K), tiny
    x_b = x_f32.astype(jnp.bfloat16)
    y_b = y_ref[...].astype(jnp.int32).astype(jnp.float32).astype(jnp.bfloat16)

    # Raw integer matmul on the MXU (products <= 255*255, f32 accumulate: exact).
    acc = jnp.dot(x_b, y_b, preferred_element_type=jnp.float32)        # (M, TN)

    # Zero-point correction terms (O(M) and O(TN) work only).
    row_sum_x = jnp.sum(x_f32, axis=1, keepdims=True)                  # (M, 1)
    ones_row = jnp.ones((1, k), jnp.bfloat16)
    col_sum_y = jnp.dot(ones_row, y_b,
                        preferred_element_type=jnp.float32)            # (1, TN)

    corr = (acc
            - jnp.float32(Y_ZP) * row_sum_x
            - jnp.float32(X_ZP) * col_sum_y
            + jnp.float32(k * X_ZP * Y_ZP))
    o_ref[...] = jnp.float32(X_SCALE * Y_SCALE) * corr


def _choose_tn(K, N):
    """Pick the N tile width: full N for small problems, else a 128-multiple
    sized so double-buffered uint8 tiles + bf16 staging stay well inside the
    smallest default scoped-VMEM budget (v7x)."""
    if N <= 512:
        return N                         # full-dim block: exempt from lane alignment
    budget = 16 * 1024 * 1024            # conservative slice of v7x's 32 MiB default
    per_col = 6 * max(K, 1)              # ~2x u8 (double-buffer) + bf16 staging bytes/col
    tn = (budget // per_col) // 128 * 128
    return int(max(128, min(2048, tn)))


def aten_mm_quint8(x, y):
    """x: uint8 [M, K], y: uint8 [K, N] -> float32 [M, N]."""
    M, K = x.shape
    K2, N = y.shape
    assert K == K2, "inner dims must match"
    TN = _choose_tn(K, N)

    return pl.pallas_call(
        _mm_quint8_kernel,
        out_shape=jax.ShapeDtypeStruct((M, N), jnp.float32),
        grid=(pl.cdiv(N, TN),),
        in_specs=[
            pl.BlockSpec((M, K), lambda j: (0, 0)),    # x resident across N tiles
            pl.BlockSpec((K, TN), lambda j: (0, j)),   # stream y over N (double-buffered)
        ],
        out_specs=pl.BlockSpec((M, TN), lambda j: (0, j)),
        compiler_params=pltpu.CompilerParams(
            dimension_semantics=("parallel",)),        # shards N tiles across 2 TCs on v7x
    )(x, y)


def _reference(x, y):
    x_deq = (x.astype(jnp.float32) - X_ZP) * X_SCALE
    y_deq = (y.astype(jnp.float32) - Y_ZP) * Y_SCALE
    return x_deq @ y_deq


if __name__ == "__main__":
    # Shapes from the module annotation: x [3, 4] uint8, y [4, 3] uint8.
    M, K, N = 3, 4, 3
    key = jax.random.PRNGKey(0)
    kx, ky = jax.random.split(key)
    x = jax.random.randint(kx, (M, K), 0, 256, dtype=jnp.int32).astype(jnp.uint8)
    y = jax.random.randint(ky, (K, N), 0, 256, dtype=jnp.int32).astype(jnp.uint8)

    z = aten_mm_quint8(x, y)
    jax.block_until_ready(z)

    z_ref = _reference(x, y)
    assert z.shape == (M, N) and z.dtype == jnp.float32
    assert jnp.allclose(z, z_ref, rtol=1e-5, atol=1e-3), "mismatch vs reference"
    print("KERNEL_OK")
</pallas_src>

<mosaic_0001>
module attributes {stable_mosaic.version = 11 : i64} {
  func.func @_mm_quint8_kernel(%arg0: i32, %arg1: memref<3x4xi8, #tpu.memory_space<vmem>>, %arg2: memref<4x3xi8, #tpu.memory_space<vmem>>, %arg3: memref<3x3xf32, #tpu.memory_space<vmem>>) attributes {dimension_semantics = [#tpu.dimension_semantics<parallel>], iteration_bounds = array<i64: 1>, scalar_prefetch = 0 : i64, scratch_operands = 0 : i64, tpu.core_type = #tpu.core_type<tc>, window_params = [{pipeline_mode = #tpu.pipeline_mode<synchronous>, transform_indices = @transform_0, window_bounds = array<i64: 3, 4>}, {transform_indices = @transform_1, window_bounds = array<i64: 4, 3>}, {transform_indices = @transform_2, window_bounds = array<i64: 3, 3>}]} {
    %c0 = arith.constant 0 : index
    %c0_0 = arith.constant 0 : index
    %0 = vector.load %arg1[%c0, %c0_0] : memref<3x4xi8, #tpu.memory_space<vmem>>, vector<3x4xi8>
    %1 = arith.extui %0 : vector<3x4xi8> to vector<3x4xi32>
    %2 = arith.sitofp %1 : vector<3x4xi32> to vector<3x4xf32>
    %3 = arith.truncf %2 : vector<3x4xf32> to vector<3x4xbf16>
    %c0_1 = arith.constant 0 : index
    %c0_2 = arith.constant 0 : index
    %4 = vector.load %arg2[%c0_1, %c0_2] : memref<4x3xi8, #tpu.memory_space<vmem>>, vector<4x3xi8>
    %5 = arith.extui %4 : vector<4x3xi8> to vector<4x3xi32>
    %6 = arith.sitofp %5 : vector<4x3xi32> to vector<4x3xf32>
    %7 = arith.truncf %6 : vector<4x3xf32> to vector<4x3xbf16>
    %cst = arith.constant dense<0.000000e+00> : vector<3x3xf32>
    %8 = tpu.matmul %3, %7, %cst {dimension_numbers = #tpu.dot_dimension_numbers<[1], [0], [0], [1], [0, 0, 1, 1], [], []>} : vector<3x4xbf16>, vector<4x3xbf16>, vector<3x3xf32> -> vector<3x3xf32>
    %cst_3 = arith.constant dense<0.000000e+00> : vector<3xf32>
    %9 = vector.multi_reduction <add>, %2, %cst_3 [1] : vector<3x4xf32> to vector<3xf32>
    %10 = vector.shape_cast %9 : vector<3xf32> to vector<3x1xf32>
    %cst_4 = arith.constant 1.000000e+00 : bf16
    %11 = vector.broadcast %cst_4 : bf16 to vector<1x4xbf16>
    %cst_5 = arith.constant dense<0.000000e+00> : vector<1x3xf32>
    %12 = tpu.matmul %11, %7, %cst_5 {dimension_numbers = #tpu.dot_dimension_numbers<[1], [0], [0], [1], [0, 0, 1, 1], [], []>} : vector<1x4xbf16>, vector<4x3xbf16>, vector<1x3xf32> -> vector<1x3xf32>
    %cst_6 = arith.constant 1.600000e+02 : f32
    %13 = vector.broadcast %cst_6 : f32 to vector<3x1xf32>
    %14 = arith.mulf %13, %10 : vector<3x1xf32>
    %15 = vector.broadcast %14 : vector<3x1xf32> to vector<3x3xf32>
    %16 = arith.subf %8, %15 : vector<3x3xf32>
    %cst_7 = arith.constant 6.500000e+01 : f32
    %17 = vector.broadcast %cst_7 : f32 to vector<1x3xf32>
    %18 = arith.mulf %17, %12 : vector<1x3xf32>
    %19 = vector.broadcast %18 : vector<1x3xf32> to vector<3x3xf32>
    %20 = arith.subf %16, %19 : vector<3x3xf32>
    %cst_8 = arith.constant 4.160000e+04 : f32
    %21 = vector.broadcast %cst_8 : f32 to vector<3x3xf32>
    %22 = arith.addf %20, %21 : vector<3x3xf32>
    %cst_9 = arith.constant 4.278500e-03 : f32
    %23 = vector.broadcast %cst_9 : f32 to vector<3x3xf32>
    %24 = arith.mulf %23, %22 : vector<3x3xf32>
    %c0_10 = arith.constant 0 : index
    %c0_11 = arith.constant 0 : index
    %25 = vector.load %arg3[%c0_10, %c0_11] : memref<3x3xf32, #tpu.memory_space<vmem>>, vector<3x3xf32>
    tpu.vector_store %arg3[%c0_10, %c0_11], %24 {strides = array<i32>} : memref<3x3xf32, #tpu.memory_space<vmem>>, vector<3x3xf32>,
    return
  }
  func.func @transform_0(%arg0: i32) -> (i32, i32) {
    %c0_i32 = arith.constant 0 : i32
    %c0_i32_0 = arith.constant 0 : i32
    %c0_i32_1 = arith.constant 0 : i32
    return %c0_i32, %c0_i32_0 : i32, i32
  }
  func.func @transform_1(%arg0: i32) -> (i32, i32) {
    %c0_i32 = arith.constant 0 : i32
    %c0_i32_0 = arith.constant 0 : i32
    return %c0_i32, %arg0 : i32, i32
  }
  func.func @transform_2(%arg0: i32) -> (i32, i32) {
    %c0_i32 = arith.constant 0 : i32
    %c0_i32_0 = arith.constant 0 : i32
    return %c0_i32, %arg0 : i32, i32
  }
}

</mosaic_0001>

<llo_original>
// kernel: tpu_custom_call.1
$region0: #{tpu_custom_call.1}
  #allocation0 [shape = 'u32[]', space=smem, size = 0x4, offset = 0x4, fixed_abs, tag = 'smem constant byte address 0x4 - core index']
  #allocation1 [shape = 'u32[144,128]{1,0:T(1,128)}', space=vmem, size = 0x12000, scoped, tag = 'internal scratch']
  %s0 = inlined_call_operand.hbm [shape: u8[3,4], index: 0, kind: input, shape index: {}]
  %s1 = inlined_call_operand.vmem [shape: u8[4,3], index: 1, kind: input, shape index: {}]
  %s2 = inlined_call_operand.hbm [shape: f32[3,3], index: 2, kind: output, shape index: {}]
  %s3 = sld [smem:[#allocation0]]
  $region22: #{tpu_custom_call.1} parent=0
    _
  %s5 = ssub.s32 1, %s3
  %s6 = scalar_select 0, %s5, %s3
  $region1: #{tpu_custom_call.1} parent=0
    #allocation2 [shape = 'u8[512]{0}', space=vmem, size = 0x400, scoped, tag = 'input window, operand 0, single buffered']
    #allocation3 [shape = 's32[1]{0}', space=sflag, size = 0x4, scoped, tag = 'scoped memory for tpu_custom_call.1']
    #allocation4 [shape = 's32[1]{0}', space=sflag, size = 0x4, scoped, tag = 'scoped memory for tpu_custom_call.1']
    #allocation5 [shape = 'u8[2048]{0}', space=vmem, size = 0x800, scoped, tag = 'output window, operand 0, single buffered']
    %7 = vsyncpa [#allocation3], 0
    %8 = vsyncpa [#allocation4], 0
    // Predicated region
    $region2: #{tpu_custom_call.1} parent=1 // pred_check
      _
    $region3: #{tpu_custom_call.1} parent=1 // pred_check_branch
      %10 = sbr.rel (0) target = $region5
    $region4: #{tpu_custom_call.1} parent=1 // pred_region
      %s12 = ssub.s32 16, 16
      %13 = vsyncadd [#allocation3], %s12
      %s15 = sshll.u32 [#allocation2], 4
      %s16 = int_to_ptr.vmem [resolvable:$true] %s15
      %18 = dma.hbm_to_vmem [thread:$0]  %s0, 16, %s16, [#allocation3]
    $region5: #{tpu_custom_call.1} parent=1 // pred_fallthru
      _
    // Predicated region
    $region6: #{tpu_custom_call.1} parent=1 // pred_check
      _
    $region7: #{tpu_custom_call.1} parent=1 // pred_check_branch
      %20 = sbr.rel (0) target = $region9
    $region8: #{tpu_custom_call.1} parent=1 // pred_region
      _
    $region9: #{tpu_custom_call.1} parent=1 // pred_fallthru
      _
    // Predicated region
    $region10: #{tpu_custom_call.1} parent=1 // pred_check
      _
    $region11: #{tpu_custom_call.1} parent=1 // pred_check_branch
      %22 = sbr.rel (0) target = $region13
    $region12: #{tpu_custom_call.1} parent=1 // pred_region
      %23 = dma.done [#allocation3], 16
    $region13: #{tpu_custom_call.1} parent=1 // pred_fallthru
      _
    %v26 = vld [vmem:[#allocation2] sm:$0x1]
    %v27 = vunpack.c.0.s8 %v26
    %v28 = vand.u32 %v27, 255
    %v29 = vcvt.s32.f32 %v28
    %v30 = vunpack.c.l.u8.bf16 %v26
    %v31 = vld [vmem:[%s1] sm:$0x1]
    %v32 = vunpack.c.l.u8.bf16 %v31
    %vm33 = vcmask 31744
    %v35 = vsel %vm33, %v30, 0
    %vm37 = vcmask 1041408
    %v39 = vsel %vm37, %v32, 0
    %41 = vmatprep.subr.bf16.mxu0 0
    %42 = vmatpush1.bf16.msra.mxu0 %v39
    %43 = vmatprep.subr.bf16.mxu0 0
    %44 = vmatpush1.bf16.msra.mxu0 0
    %45 = vmatprep.subr.bf16.mxu0 0
    %46 = vmatpush1.bf16.msra.mxu0 0
    %47 = vmatprep.subr.bf16.mxu0 0
    %48 = vmatpush1.bf16.msra.mxu0 0
    %49 = vmatprep.subr.bf16.mxu0 0
    %50 = vmatpush1.bf16.msra.mxu0 0
    %51 = vmatprep.subr.bf16.mxu0 0
    %52 = vmatpush1.bf16.msra.mxu0 0
    %53 = vmatprep.subr.bf16.mxu0 0
    %54 = vmatpush1.bf16.msra.mxu0 0
    %55 = vmatprep.subr.bf16.mxu0 0
    %56 = vmatpush1.bf16.msra.mxu0 0
    %57 = vmatprep.subr.bf16.mxu0 0
    %58 = vmatpush1.bf16.msra.mxu0 0
    %59 = vmatprep.subr.bf16.mxu0 0
    %60 = vmatpush1.bf16.msra.mxu0 0
    %61 = vmatprep.subr.bf16.mxu0 0
    %62 = vmatpush1.bf16.msra.mxu0 0
    %63 = vmatprep.subr.bf16.mxu0 0
    %64 = vmatpush1.bf16.msra.mxu0 0
    %65 = vmatprep.subr.bf16.mxu0 0
    %66 = vmatpush1.bf16.msra.mxu0 0
    %67 = vmatprep.subr.bf16.mxu0 0
    %68 = vmatpush1.bf16.msra.mxu0 0
    %69 = vmatprep.subr.bf16.mxu0 0
    %70 = vmatpush1.bf16.msra.mxu0 0
    %71 = vmatprep.subr.bf16.mxu0 0
    %72 = vmatpush1.bf16.msra.mxu0 0
    %73 = vmatprep.mubr.bf16.mxu0 0
    %74 = vmatmul.mubr.bf16.gmra.mrb[0].mxu0 %v35
    %v75 = vpop.f32.mrb[0].mxu0
    %v76 = vadd.f32 0.0, %v75
    %v77 = vpop.f32.mrb[0].mxu0
    %v78 = vpop.f32.mrb[0].mxu0
    %v79 = vpop.f32.mrb[0].mxu0
    %80 = vdwg.mxu0
    %vm81 = vcmask 26624
    %v82 = vsel %vm81, %v29, 0.0
    %83 = vadd.xlane.f32.xlu0 %v82
    %v84 = vpop.xlane.xlu0 %83
    %v86 = vsel %vm33, 1065369472, 0
    %88 = vmatprep.subr.bf16.mxu0 0
    %89 = vmatpush1.bf16.msra.mxu0 %v39
    %90 = vmatprep.subr.bf16.mxu0 0
    %91 = vmatpush1.bf16.msra.mxu0 0
    %92 = vmatprep.subr.bf16.mxu0 0
    %93 = vmatpush1.bf16.msra.mxu0 0
    %94 = vmatprep.subr.bf16.mxu0 0
    %95 = vmatpush1.bf16.msra.mxu0 0
    %96 = vmatprep.subr.bf16.mxu0 0
    %97 = vmatpush1.bf16.msra.mxu0 0
    %98 = vmatprep.subr.bf16.mxu0 0
    %99 = vmatpush1.bf16.msra.mxu0 0
    %100 = vmatprep.subr.bf16.mxu0 0
    %101 = vmatpush1.bf16.msra.mxu0 0
    %102 = vmatprep.subr.bf16.mxu0 0
    %103 = vmatpush1.bf16.msra.mxu0 0
    %104 = vmatprep.subr.bf16.mxu0 0
    %105 = vmatpush1.bf16.msra.mxu0 0
    %106 = vmatprep.subr.bf16.mxu0 0
    %107 = vmatpush1.bf16.msra.mxu0 0
    %108 = vmatprep.subr.bf16.mxu0 0
    %109 = vmatpush1.bf16.msra.mxu0 0
    %110 = vmatprep.subr.bf16.mxu0 0
    %111 = vmatpush1.bf16.msra.mxu0 0
    %112 = vmatprep.subr.bf16.mxu0 0
    %113 = vmatpush1.bf16.msra.mxu0 0
    %114 = vmatprep.subr.bf16.mxu0 0
    %115 = vmatpush1.bf16.msra.mxu0 0
    %116 = vmatprep.subr.bf16.mxu0 0
    %117 = vmatpush1.bf16.msra.mxu0 0
    %118 = vmatprep.subr.bf16.mxu0 0
    %119 = vmatpush1.bf16.msra.mxu0 0
    %120 = vmatprep.mubr.bf16.mxu0 0
    %121 = vmatmul.mubr.bf16.gmra.mrb[0].mxu0 %v86
    %v122 = vpop.f32.mrb[0].mxu0
    %v123 = vadd.f32 0.0, %v122
    %v124 = vpop.f32.mrb[0].mxu0
    %v125 = vpop.f32.mrb[0].mxu0
    %v126 = vpop.f32.mrb[0].mxu0
    %127 = vdwg.mxu0
    %v128 = vmul.f32 %v84, 160.0
    %v129 = vsub.f32 %v76, %v128
    %v130 = vmul.f32 %v123, 65.0
    %v131 = vlaneseq
    %v132 = vshrl.u32 %v131, 7
    %v133 = vsub.s32 0, %v132
    %v134 = vrot.slane %v130, %v133
    %v135 = vsub.f32 %v129, %v134
    %v136 = vadd.f32 %v135, 41600.0
    %v137 = vmul.f32 %v136, 0.0042785
    %vm138 = vcmask 18432
    %139 = vst.msk [vmem:[#allocation5] sm:$0x7] %vm138, %v137
    // Predicated region
    $region14: #{tpu_custom_call.1} parent=1 // pred_check
      _
    $region15: #{tpu_custom_call.1} parent=1 // pred_check_branch
      %141 = sbr.rel (0) target = $region17
    $region16: #{tpu_custom_call.1} parent=1 // pred_region
      %s143 = ssub.s32 64, 64
      %144 = vsyncadd [#allocation4], %s143
      %s146 = sshll.u32 [#allocation5], 4
      %s147 = int_to_ptr.vmem [resolvable:$true] %s146
      %149 = dma.vmem_to_hbm [thread:$0]  %s147, 64, %s2, [#allocation4]
    $region17: #{tpu_custom_call.1} parent=1 // pred_fallthru
      _
    // Predicated region
    $region18: #{tpu_custom_call.1} parent=1 // pred_check
      _
    $region19: #{tpu_custom_call.1} parent=1 // pred_check_branch
      %151 = sbr.rel (0) target = $region21
    $region20: #{tpu_custom_call.1} parent=1 // pred_region
      %152 = dma.done [#allocation4], 64
    $region21: #{tpu_custom_call.1} parent=1 // pred_fallthru
      _
    %153 = vsyncpa [#allocation3], 1
    %154 = vsyncpa [#allocation4], 1

</llo_original>
